<compile_context>
chip_gen: v7x
topology: tpu7x:2x2x1
jax: 0.10.0
libtpu: 0.0.40
codegen_flags: <defaults>
</compile_context>

<pallas_src>
import functools

import jax
import jax.numpy as jnp
from jax.experimental import pallas as pl
from jax.experimental.pallas import tpu as pltpu


# -----------------------------------------------------------------------------
# Kernels
# -----------------------------------------------------------------------------
def _eca_fused_kernel(bias_ref, x_ref, band_ref, o_ref, *, inv_n, has_cls):
    """Single-pass ECA on one (Bt, Np, C) tile.

    bias_ref : (1,) SMEM scalar (Conv1d bias), via scalar prefetch.
    x_ref    : (Bt, Np, C) input tile, native dtype.
    band_ref : (C, C) f32 banded conv matrix (resident; constant index_map).
    o_ref    : (Bt, Np, C) output tile.
    """
    x = x_ref[...]
    # Pooled per-channel sum over tokens, accumulated in f32 without
    # materializing a full f32 copy of the tile.
    s = jnp.sum(x, axis=1, dtype=jnp.float32)                 # (Bt, C)
    if has_cls:
        s = s - x[:, 0, :].astype(jnp.float32)                # exclude cls row
    mean = s * inv_n

    # Conv1d(1, 1, k, zero-padded) across channels == banded matmul on the MXU.
    y = jnp.dot(mean, band_ref[...], preferred_element_type=jnp.float32)
    gate = jax.nn.sigmoid(y + bias_ref[0]).astype(x.dtype)     # (Bt, C)

    o_ref[...] = x * gate[:, None, :]
    if has_cls:
        o_ref[:, 0:1, :] = x[:, 0:1, :]                        # cls row untouched


def _eca_pool_kernel(x_ref, sum_ref, *, np_total, tn, ragged):
    """Two-pass fallback, pass 1: accumulate per-channel token sums."""
    n = pl.program_id(1)

    @pl.when(n == 0)
    def _():
        sum_ref[...] = jnp.zeros_like(sum_ref)

    x = x_ref[...]                                             # (1, tn, C)
    if ragged:
        tok = jax.lax.broadcasted_iota(jnp.int32, (1, tn, 1), 1) + n * tn
        x = jnp.where(tok < np_total, x, jnp.zeros_like(x))    # mask OOB rows
    sum_ref[...] += jnp.sum(x, axis=1, keepdims=True, dtype=jnp.float32)


def _eca_scale_kernel(x_ref, gate_ref, o_ref, *, has_cls):
    """Two-pass fallback, pass 2: broadcast-multiply by the per-channel gate."""
    g = gate_ref[...].astype(o_ref.dtype)                      # (1, 1, C)
    o_ref[...] = x_ref[...] * g
    if has_cls:
        @pl.when(pl.program_id(1) == 0)
        def _():
            o_ref[:, 0:1, :] = x_ref[:, 0:1, :]                # cls row untouched


# -----------------------------------------------------------------------------
# Host-side helpers
# -----------------------------------------------------------------------------
def _banded_conv_matrix(conv_w, C):
    """(C, C) f32 matrix so that mean @ band == zero-padded Conv1d(1,1,k)."""
    w = conv_w.reshape(-1).astype(jnp.float32)
    k = int(w.shape[0])
    pad = (k - 1) // 2
    src = jnp.arange(C, dtype=jnp.int32)[:, None]              # source channel
    dst = jnp.arange(C, dtype=jnp.int32)[None, :]              # output channel
    diff = src - dst
    band = jnp.zeros((C, C), jnp.float32)
    # TODO(synk): for very large C (>~1024) skip the band and do k shifted
    # multiply-adds on the pooled (Bt, C) mean instead (band wastes VMEM there).
    for t in range(k):                                         # k is tiny/static
        band = band + jnp.where(diff == (t - pad), w[t], 0.0)
    return band


def _conv_sigmoid_gate(mean, conv_w, conv_b):
    """Tiny (B, C) Conv1d(1,1,k)+sigmoid in plain JAX (two-pass path only)."""
    w = conv_w.reshape(-1).astype(jnp.float32)
    b = conv_b.reshape(-1).astype(jnp.float32)
    k = int(w.shape[0])
    pad = (k - 1) // 2
    C = mean.shape[-1]
    padded = jnp.pad(mean, ((0, 0), (pad, pad)))
    y = jnp.full_like(mean, b[0])
    for t in range(k):
        y = y + w[t] * padded[:, t:t + C]
    return jax.nn.sigmoid(y)


def _vmem_capacity_bytes():
    try:
        cap = getattr(pltpu.get_tpu_info(), "vmem_capacity_bytes", None)
        if cap:
            return int(cap)
    except Exception:
        pass
    return 64 << 20            # conservative (v7x per-TC VMEM)


def _num_tensorcores():
    try:
        kind = jax.devices()[0].device_kind.lower()
        if "v7" in kind or "v4" in kind or "v5p" in kind:
            return 2
    except Exception:
        pass
    return 1                   # v5e / v6e: one TensorCore per chip


# -----------------------------------------------------------------------------
# Public wrapper
# -----------------------------------------------------------------------------
def eca_attention(x, conv_w, conv_b, H, W, use_cls_token=False, *,
                  block_bytes_target=None, force_two_pass=False):
    """ECAAttention.forward.

    x       : (B, N, C)  or (B, N+1, C) when use_cls_token=True, N = H*W.
    conv_w  : (1, 1, k)  Conv1d weight (k odd).
    conv_b  : (1,)       Conv1d bias.
    """
    B, Np, C = x.shape
    N = H * W
    if use_cls_token:
        assert Np == N + 1, (Np, N)
    else:
        assert Np == N, (Np, N)
    # TODO(synk): if C is not a multiple of 128, pad C in the wrapper so output
    # stores stay lane-dense (avoids masked vst.msk partial stores).

    itemsize = x.dtype.itemsize
    vmem_cap = _vmem_capacity_bytes()
    num_tc = _num_tensorcores()
    budget = max(vmem_cap - (8 << 20), 16 << 20)     # leave Mosaic headroom

    if block_bytes_target is None:
        # Big HBM-roofline tiles: 1-8 MiB, with 2x(in+out) buffers <= ~60% VMEM.
        block_bytes_target = int(min(8 << 20, max(1 << 20, (vmem_cap * 6 // 10) // 4)))

    bias = conv_b.reshape(-1).astype(jnp.float32)    # (1,) -> SMEM scalar prefetch
    band = _banded_conv_matrix(conv_w, C)            # (C, C) f32, stays resident
    band_bytes = C * C * 4

    per_batch_bytes = Np * C * itemsize
    margin = 2 << 20

    def fused_vmem(bt_):
        # in + out double-buffered tiles + band (double-buffered) + margin.
        return 4 * bt_ * per_batch_bytes + 2 * band_bytes + margin

    # --- batch-packed tile size for the single-pass path.
    bt = max(1, min(B, block_bytes_target // max(per_batch_bytes, 1)))
    if num_tc >= 2 and B >= 2:
        # >= 2 grid steps per TensorCore so each core keeps its pipeline fed,
        # provided tiles stay >= ~1 MiB; otherwise at least split across cores.
        cap = max(1, B // min(B, 2 * num_tc))
        if cap * per_batch_bytes < (1 << 20):
            cap = max(1, B // 2)
        bt = min(bt, cap)
    while bt > 1 and (B % bt or fused_vmem(bt) > budget):
        bt -= 1

    use_two_pass = bool(force_two_pass) or fused_vmem(bt) > budget

    if not use_two_pass:
        grid = (B // bt,)
        vmem_limit = int(min(max(fused_vmem(bt), 16 << 20), budget))
        cost = pl.CostEstimate(
            flops=int(2 * B * C * C + B * Np * C),
            transcendentals=int(B * C),
            bytes_accessed=int(2 * B * Np * C * itemsize + band_bytes),
        )
        kernel = functools.partial(
            _eca_fused_kernel, inv_n=1.0 / N, has_cls=use_cls_token)
        return pl.pallas_call(
            kernel,
            out_shape=jax.ShapeDtypeStruct((B, Np, C), x.dtype),
            grid_spec=pltpu.PrefetchScalarGridSpec(
                num_scalar_prefetch=1,
                grid=grid,
                in_specs=[
                    pl.BlockSpec((bt, Np, C), lambda b, _wb: (b, 0, 0)),
                    pl.BlockSpec((C, C), lambda b, _wb: (0, 0)),
                ],
                out_specs=pl.BlockSpec((bt, Np, C), lambda b, _wb: (b, 0, 0)),
            ),
            compiler_params=pltpu.CompilerParams(
                dimension_semantics=("parallel",),
                vmem_limit_bytes=vmem_limit,
            ),
            cost_estimate=cost,
        )(bias, x, band)

    # ------------------------------------------------------------------
    # Two-pass token-tiled fallback: a single (1, Np, C) slab does not fit the
    # per-core VMEM (or the caller forced it).  Pass 1 reduces x to per-batch
    # channel sums, the tiny conv+sigmoid gate runs as plain XLA on (B, C),
    # pass 2 re-reads x tiled over tokens and writes the gated output.
    # ------------------------------------------------------------------
    row_bytes = C * itemsize
    max_tile = max(budget // 6, 1 << 20)
    tn = max(8, (min(block_bytes_target, max_tile) // max(row_bytes, 1)) // 8 * 8)
    if Np <= 8:
        tn = Np
    else:
        tn = min(tn, (Np // 8) * 8)
    nt = pl.cdiv(Np, tn)
    ragged = (Np % tn) != 0
    tile_bytes = tn * C * itemsize

    sums = pl.pallas_call(
        functools.partial(_eca_pool_kernel, np_total=Np, tn=tn, ragged=ragged),
        out_shape=jax.ShapeDtypeStruct((B, 1, C), jnp.float32),
        grid=(B, nt),
        in_specs=[pl.BlockSpec((1, tn, C), lambda b, n: (b, n, 0))],
        out_specs=pl.BlockSpec((1, 1, C), lambda b, n: (b, 0, 0)),
        compiler_params=pltpu.CompilerParams(
            dimension_semantics=("parallel", "arbitrary"),
            vmem_limit_bytes=int(min(max(2 * tile_bytes + tn * C * 4 + margin,
                                         16 << 20), budget)),
        ),
        cost_estimate=pl.CostEstimate(
            flops=int(B * Np * C), transcendentals=0,
            bytes_accessed=int(B * Np * C * itemsize)),
    )(x)

    sums = sums[:, 0, :]
    if use_cls_token:
        sums = sums - x[:, 0, :].astype(jnp.float32)           # exclude cls row
    gate = _conv_sigmoid_gate(sums * (1.0 / N), conv_w, conv_b)  # (B, C) f32
    gate = gate.reshape(B, 1, C)

    return pl.pallas_call(
        functools.partial(_eca_scale_kernel, has_cls=use_cls_token),
        out_shape=jax.ShapeDtypeStruct((B, Np, C), x.dtype),
        grid=(B, nt),
        in_specs=[pl.BlockSpec((1, tn, C), lambda b, n: (b, n, 0)),
                  pl.BlockSpec((1, 1, C), lambda b, n: (b, 0, 0))],
        out_specs=pl.BlockSpec((1, tn, C), lambda b, n: (b, n, 0)),
        compiler_params=pltpu.CompilerParams(
            dimension_semantics=("parallel", "parallel"),
            vmem_limit_bytes=int(min(max(4 * tile_bytes + margin, 16 << 20), budget)),
        ),
        cost_estimate=pl.CostEstimate(
            flops=int(B * Np * C), transcendentals=0,
            bytes_accessed=int(2 * B * Np * C * itemsize)),
    )(x, gate)


# -----------------------------------------------------------------------------
# Pure-JAX reference matching the PyTorch forward
# -----------------------------------------------------------------------------
def eca_reference(x, conv_w, conv_b, use_cls_token=False):
    w = conv_w.reshape(-1).astype(jnp.float32)
    b = conv_b.reshape(-1).astype(jnp.float32)
    k = w.shape[0]
    pad = (k - 1) // 2
    if use_cls_token:
        cls_feat, body = x[:, :1, :], x[:, 1:, :]
    else:
        cls_feat, body = None, x
    C = body.shape[-1]
    mean = jnp.mean(body.astype(jnp.float32), axis=1, keepdims=True)   # (B,1,C)
    padded = jnp.pad(mean, ((0, 0), (0, 0), (pad, pad)))
    y = jnp.zeros_like(mean) + b[0]
    for t in range(k):
        y = y + w[t] * padded[:, :, t:t + C]
    gate = jax.nn.sigmoid(y)
    out = (body.astype(jnp.float32) * gate).astype(x.dtype)
    if use_cls_token:
        out = jnp.concatenate([cls_feat, out], axis=1)
    return out


if __name__ == "__main__":
    key = jax.random.PRNGKey(0)
    kx, kw, kb, kc, kd, ke = jax.random.split(key, 6)

    B, C, H, W = 2, 128, 8, 8
    N = H * W

    # Deterministic Conv1d(1, 1, kernel_size=3, padding=1) parameters.
    conv_w = jax.random.normal(kw, (1, 1, 3), dtype=jnp.float32) * 0.5
    conv_b = jax.random.normal(kb, (1,), dtype=jnp.float32) * 0.1

    # Case 1: plain (B, H*W, C) input, single-pass fused kernel.
    x = jax.random.normal(kx, (B, N, C), dtype=jnp.float32)
    out = jax.block_until_ready(eca_attention(x, conv_w, conv_b, H, W))
    ref = eca_reference(x, conv_w, conv_b, use_cls_token=False)
    assert out.shape == (B, N, C)
    assert jnp.allclose(out, ref, atol=1e-4, rtol=1e-4), "mismatch (no cls)"

    # Case 2: cls token prepended; handled fully inside the fused kernel.
    xc = jax.random.normal(kc, (B, N + 1, C), dtype=jnp.float32)
    outc = jax.block_until_ready(
        eca_attention(xc, conv_w, conv_b, H, W, use_cls_token=True))
    refc = eca_reference(xc, conv_w, conv_b, use_cls_token=True)
    assert outc.shape == (B, N + 1, C)
    assert jnp.allclose(outc, refc, atol=1e-4, rtol=1e-4), "mismatch (cls)"

    # Case 3: force a multi-step batch-tiled grid (bt < B).
    xb = jax.random.normal(kd, (4, N, C), dtype=jnp.float32)
    outb = jax.block_until_ready(
        eca_attention(xb, conv_w, conv_b, H, W, block_bytes_target=N * C * 4))
    refb = eca_reference(xb, conv_w, conv_b, use_cls_token=False)
    assert jnp.allclose(outb, refb, atol=1e-4, rtol=1e-4), "mismatch (tiled)"

    # Case 4: forced token-tiled two-pass fallback (without and with cls token,
    # the latter exercising the ragged last token tile).
    outf = jax.block_until_ready(
        eca_attention(x, conv_w, conv_b, H, W, force_two_pass=True,
                      block_bytes_target=8 * C * 4))
    assert jnp.allclose(outf, ref, atol=1e-4, rtol=1e-4), "mismatch (two-pass)"

    xe = jax.random.normal(ke, (B, N + 1, C), dtype=jnp.float32)
    outfc = jax.block_until_ready(
        eca_attention(xe, conv_w, conv_b, H, W, use_cls_token=True,
                      force_two_pass=True, block_bytes_target=8 * C * 4))
    reffc = eca_reference(xe, conv_w, conv_b, use_cls_token=True)
    assert jnp.allclose(outfc, reffc, atol=1e-4, rtol=1e-4), "mismatch (two-pass cls)"

    print("KERNEL_OK")
</pallas_src>

<mosaic_0001>
module attributes {stable_mosaic.version = 11 : i64} {
  func.func @_eca_fused_kernel(%arg0: i32, %arg1: memref<1xf32, #tpu.memory_space<smem>>, %arg2: memref<2x64x128xf32, #tpu.memory_space<vmem>>, %arg3: memref<128x128xf32, #tpu.memory_space<vmem>>, %arg4: memref<2x64x128xf32, #tpu.memory_space<vmem>>) attributes {dimension_semantics = [#tpu.dimension_semantics<parallel>], iteration_bounds = array<i64: 1>, scalar_prefetch = 1 : i64, scratch_operands = 0 : i64, tpu.core_type = #tpu.core_type<tc>, window_params = [{transform_indices = @transform_0, window_bounds = array<i64: 2, 64, 128>}, {pipeline_mode = #tpu.pipeline_mode<synchronous>, transform_indices = @transform_1, window_bounds = array<i64: 128, 128>}, {transform_indices = @transform_2, window_bounds = array<i64: 2, 64, 128>}]} {
    %c0 = arith.constant 0 : index
    %c0_0 = arith.constant 0 : index
    %c0_1 = arith.constant 0 : index
    %0 = vector.load %arg2[%c0, %c0_0, %c0_1] : memref<2x64x128xf32, #tpu.memory_space<vmem>>, vector<2x64x128xf32>
    %cst = arith.constant dense<0.000000e+00> : vector<2x128xf32>
    %1 = vector.multi_reduction <add>, %0, %cst [1] : vector<2x64x128xf32> to vector<2x128xf32>
    %cst_2 = arith.constant 1.562500e-02 : f32
    %2 = vector.broadcast %cst_2 : f32 to vector<2x128xf32>
    %3 = arith.mulf %1, %2 : vector<2x128xf32>
    %c0_3 = arith.constant 0 : index
    %c0_4 = arith.constant 0 : index
    %4 = vector.load %arg3[%c0_3, %c0_4] : memref<128x128xf32, #tpu.memory_space<vmem>>, vector<128x128xf32>
    %cst_5 = arith.constant dense<0.000000e+00> : vector<2x128xf32>
    %5 = tpu.matmul %3, %4, %cst_5 {dimension_numbers = #tpu.dot_dimension_numbers<[1], [0], [0], [1], [0, 0, 1, 1], [], []>} : vector<2x128xf32>, vector<128x128xf32>, vector<2x128xf32> -> vector<2x128xf32>
    %c0_6 = arith.constant 0 : index
    %6 = memref.load %arg1[%c0_6] : memref<1xf32, #tpu.memory_space<smem>>
    %7 = vector.broadcast %6 : f32 to vector<2x128xf32>
    %8 = arith.addf %5, %7 : vector<2x128xf32>
    %9 = arith.negf %8 : vector<2x128xf32>
    %10 = math.exp %9 : vector<2x128xf32>
    %cst_7 = arith.constant 1.000000e+00 : f32
    %11 = vector.broadcast %cst_7 : f32 to vector<2x128xf32>
    %12 = arith.addf %11, %10 : vector<2x128xf32>
    %13 = arith.divf %11, %12 : vector<2x128xf32>
    %14 = vector.shape_cast %13 : vector<2x128xf32> to vector<2x1x128xf32>
    %15 = vector.broadcast %14 : vector<2x1x128xf32> to vector<2x64x128xf32>
    %16 = arith.mulf %0, %15 : vector<2x64x128xf32>
    %c0_8 = arith.constant 0 : index
    %c0_9 = arith.constant 0 : index
    %c0_10 = arith.constant 0 : index
    %17 = vector.load %arg4[%c0_8, %c0_9, %c0_10] : memref<2x64x128xf32, #tpu.memory_space<vmem>>, vector<2x64x128xf32>
    tpu.vector_store %arg4[%c0_8, %c0_9, %c0_10], %16 {strides = array<i32>} : memref<2x64x128xf32, #tpu.memory_space<vmem>>, vector<2x64x128xf32>,
    return
  }
  func.func @transform_0(%arg0: i32, %arg1: memref<1xf32, #tpu.memory_space<smem>>) -> (i32, i32, i32) {
    %c0_i32 = arith.constant 0 : i32
    %c0_i32_0 = arith.constant 0 : i32
    %c0_i32_1 = arith.constant 0 : i32
    return %arg0, %c0_i32, %c0_i32_0 : i32, i32, i32
  }
  func.func @transform_1(%arg0: i32, %arg1: memref<1xf32, #tpu.memory_space<smem>>) -> (i32, i32) {
    %c0_i32 = arith.constant 0 : i32
    %c0_i32_0 = arith.constant 0 : i32
    %c0_i32_1 = arith.constant 0 : i32
    return %c0_i32, %c0_i32_0 : i32, i32
  }
  func.func @transform_2(%arg0: i32, %arg1: memref<1xf32, #tpu.memory_space<smem>>) -> (i32, i32, i32) {
    %c0_i32 = arith.constant 0 : i32
    %c0_i32_0 = arith.constant 0 : i32
    %c0_i32_1 = arith.constant 0 : i32
    return %arg0, %c0_i32, %c0_i32_0 : i32, i32, i32
  }
}

</mosaic_0001>

<llo_original>
// kernel: tpu_custom_call.1
$region0: #{tpu_custom_call.1}
  #allocation0 [shape = 'u32[]', space=smem, size = 0x4, offset = 0x4, fixed_abs, tag = 'smem constant byte address 0x4 - core index']
  #allocation1 [shape = 'u32[144,128]{1,0:T(1,128)}', space=vmem, size = 0x12000, scoped, tag = 'internal scratch']
  #allocation2 [shape = 's32[1]{0}', space=sflag, size = 0x4, scoped, tag = 'scoped memory for tpu_custom_call.1']
  #allocation3 [shape = 'f32[1]{0:T(128)S(6)}', space=smem, size = 0x200, scoped, tag = 'prefetched SMEM operand 0']
  %s0 = inlined_call_operand.<no memory space> [shape: f32[1], index: 0, kind: input, shape index: {}]
  %s1 = inlined_call_operand.hbm [shape: f32[2,64,128], index: 1, kind: input, shape index: {}]
  %s2 = inlined_call_operand.hbm [shape: f32[128,128], index: 2, kind: input, shape index: {}]
  %s3 = inlined_call_operand.hbm [shape: f32[2,64,128], index: 3, kind: output, shape index: {}]
  %s4 = sld [smem:[#allocation0]]
  $region26: #{tpu_custom_call.1} parent=0
    _
  %s6 = ssub.s32 1, %s4
  %s7 = scalar_select 0, %s6, %s4
  %8 = sst [smem:[#allocation3]] %s0
  $region1: #{tpu_custom_call.1} parent=0
    #allocation4 [shape = 'u8[65536]{0}', space=vmem, size = 0x10000, scoped, tag = 'input window, operand 1, single buffered']
    #allocation5 [shape = 's32[1]{0}', space=sflag, size = 0x4, scoped, tag = 'scoped memory for tpu_custom_call.1']
    #allocation6 [shape = 's32[1]{0}', space=sflag, size = 0x4, scoped, tag = 'scoped memory for tpu_custom_call.1']
    #allocation7 [shape = 'u8[65536]{0}', space=vmem, size = 0x10000, scoped, tag = 'input window, operand 2, single buffered']
    #allocation8 [shape = 's32[1]{0}', space=sflag, size = 0x4, scoped, tag = 'scoped memory for tpu_custom_call.1']
    #allocation9 [shape = 'u8[65536]{0}', space=vmem, size = 0x10000, scoped, tag = 'output window, operand 0, single buffered']
    %9 = vsyncpa [#allocation5], 0
    %10 = vsyncpa [#allocation8], 0
    %11 = vsyncpa [#allocation6], 0
    // Predicated region
    $region2: #{tpu_custom_call.1} parent=1 // pred_check
      _
    $region3: #{tpu_custom_call.1} parent=1 // pred_check_branch
      %13 = sbr.rel (0) target = $region5
    $region4: #{tpu_custom_call.1} parent=1 // pred_region
      %s15 = ssub.s32 2048, 2048
      %16 = vsyncadd [#allocation5], %s15
      %s17 = sshll.u32 [#allocation4], 4
      %s18 = int_to_ptr.vmem [resolvable:$true] %s17
      %23 = dma.hbm_to_vmem [thread:$0]  %s1, 2048, %s18, [#allocation5], 128, 128, 8
    $region5: #{tpu_custom_call.1} parent=1 // pred_fallthru
      _
    // Predicated region
    $region6: #{tpu_custom_call.1} parent=1 // pred_check
      _
    $region7: #{tpu_custom_call.1} parent=1 // pred_check_branch
      %25 = sbr.rel (0) target = $region9
    $region8: #{tpu_custom_call.1} parent=1 // pred_region
      %s27 = ssub.s32 2048, 2048
      %28 = vsyncadd [#allocation8], %s27
      %s29 = sshll.u32 [#allocation7], 4
      %s30 = int_to_ptr.vmem [resolvable:$true] %s29
      %35 = dma.hbm_to_vmem [thread:$0]  %s2, 2048, %s30, [#allocation8], 128, 128, 8
    $region9: #{tpu_custom_call.1} parent=1 // pred_fallthru
      _
    // Predicated region
    $region10: #{tpu_custom_call.1} parent=1 // pred_check
      _
    $region11: #{tpu_custom_call.1} parent=1 // pred_check_branch
      %37 = sbr.rel (0) target = $region13
    $region12: #{tpu_custom_call.1} parent=1 // pred_region
      %38 = dma.done [#allocation5], 2048
    $region13: #{tpu_custom_call.1} parent=1 // pred_fallthru
      _
    // Predicated region
    $region14: #{tpu_custom_call.1} parent=1 // pred_check
      _
    $region15: #{tpu_custom_call.1} parent=1 // pred_check_branch
      %40 = sbr.rel (0) target = $region17
    $region16: #{tpu_custom_call.1} parent=1 // pred_region
      %41 = dma.done [#allocation8], 2048
    $region17: #{tpu_custom_call.1} parent=1 // pred_fallthru
      _
    %v42 = vld [vmem:[#allocation4] sm:$0xff]
    %v43 = vld [vmem:[#allocation4 + $0x8] sm:$0xff]
    %v44 = vld [vmem:[#allocation4 + $0x10] sm:$0xff]
    %v45 = vld [vmem:[#allocation4 + $0x18] sm:$0xff]
    %v46 = vld [vmem:[#allocation4 + $0x20] sm:$0xff]
    %v47 = vld [vmem:[#allocation4 + $0x28] sm:$0xff]
    %v48 = vld [vmem:[#allocation4 + $0x30] sm:$0xff]
    %v49 = vld [vmem:[#allocation4 + $0x38] sm:$0xff]
    %v50 = vld [vmem:[#allocation4 + $0x40] sm:$0xff]
    %v51 = vld [vmem:[#allocation4 + $0x48] sm:$0xff]
    %v52 = vld [vmem:[#allocation4 + $0x50] sm:$0xff]
    %v53 = vld [vmem:[#allocation4 + $0x58] sm:$0xff]
    %v54 = vld [vmem:[#allocation4 + $0x60] sm:$0xff]
    %v55 = vld [vmem:[#allocation4 + $0x68] sm:$0xff]
    %v56 = vld [vmem:[#allocation4 + $0x70] sm:$0xff]
    %v57 = vld [vmem:[#allocation4 + $0x78] sm:$0xff]
    %v58 = vadd.f32 %v42, %v43
    %v59 = vadd.f32 %v58, %v44
    %v60 = vadd.f32 %v59, %v45
    %v61 = vadd.f32 %v60, %v46
    %v62 = vadd.f32 %v61, %v47
    %v63 = vadd.f32 %v62, %v48
    %v64 = vadd.f32 %v63, %v49
    %v65 = vrot.slane %v64, 4
    %v66 = vadd.f32 %v64, %v65
    %v67 = vrot.slane %v66, 2
    %v68 = vadd.f32 %v66, %v67
    %v69 = vrot.slane %v68, 1
    %v70 = vadd.f32 %v68, %v69
    %v71 = vadd.f32 %v50, %v51
    %v72 = vadd.f32 %v71, %v52
    %v73 = vadd.f32 %v72, %v53
    %v74 = vadd.f32 %v73, %v54
    %v75 = vadd.f32 %v74, %v55
    %v76 = vadd.f32 %v75, %v56
    %v77 = vadd.f32 %v76, %v57
    %v78 = vrot.slane %v77, 4
    %v79 = vadd.f32 %v77, %v78
    %v80 = vrot.slane %v79, 2
    %v81 = vadd.f32 %v79, %v80
    %v82 = vrot.slane %v81, 1
    %v83 = vadd.f32 %v81, %v82
    %v84 = vmul.f32 %v70, 0.015625
    %v85 = vmul.f32 %v83, 0.015625
    %v86 = vld [vmem:[#allocation7] sm:$0xff]
    %v87 = vld [vmem:[#allocation7 + $0x8] sm:$0xff]
    %v88 = vld [vmem:[#allocation7 + $0x10] sm:$0xff]
    %v89 = vld [vmem:[#allocation7 + $0x18] sm:$0xff]
    %v90 = vld [vmem:[#allocation7 + $0x20] sm:$0xff]
    %v91 = vld [vmem:[#allocation7 + $0x28] sm:$0xff]
    %v92 = vld [vmem:[#allocation7 + $0x30] sm:$0xff]
    %v93 = vld [vmem:[#allocation7 + $0x38] sm:$0xff]
    %v94 = vld [vmem:[#allocation7 + $0x40] sm:$0xff]
    %v95 = vld [vmem:[#allocation7 + $0x48] sm:$0xff]
    %v96 = vld [vmem:[#allocation7 + $0x50] sm:$0xff]
    %v97 = vld [vmem:[#allocation7 + $0x58] sm:$0xff]
    %v98 = vld [vmem:[#allocation7 + $0x60] sm:$0xff]
    %v99 = vld [vmem:[#allocation7 + $0x68] sm:$0xff]
    %v100 = vld [vmem:[#allocation7 + $0x70] sm:$0xff]
    %v101 = vld [vmem:[#allocation7 + $0x78] sm:$0xff]
    %s102 = sld [smem:[#allocation3]]
    %v103 = vstv %s102
    %vm106 = vcmask 1041409
    %v107 = vsel %vm106, %v85, %v84
    %109 = vmatprep.subr.mxu0 0.0
    %110 = vmatpush1.msra.mxu0 %v86
    %111 = vmatprep.subr.mxu0 0.0
    %112 = vmatpush1.msra.mxu0 %v87
    %113 = vmatprep.subr.mxu0 0.0
    %114 = vmatpush1.msra.mxu0 %v88
    %115 = vmatprep.subr.mxu0 0.0
    %116 = vmatpush1.msra.mxu0 %v89
    %117 = vmatprep.subr.mxu0 0.0
    %118 = vmatpush1.msra.mxu0 %v90
    %119 = vmatprep.subr.mxu0 0.0
    %120 = vmatpush1.msra.mxu0 %v91
    %121 = vmatprep.subr.mxu0 0.0
    %122 = vmatpush1.msra.mxu0 %v92
    %123 = vmatprep.subr.mxu0 0.0
    %124 = vmatpush1.msra.mxu0 %v93
    %125 = vmatprep.subr.mxu0 0.0
    %126 = vmatpush1.msra.mxu0 %v94
    %127 = vmatprep.subr.mxu0 0.0
    %128 = vmatpush1.msra.mxu0 %v95
    %129 = vmatprep.subr.mxu0 0.0
    %130 = vmatpush1.msra.mxu0 %v96
    %131 = vmatprep.subr.mxu0 0.0
    %132 = vmatpush1.msra.mxu0 %v97
    %133 = vmatprep.subr.mxu0 0.0
    %134 = vmatpush1.msra.mxu0 %v98
    %135 = vmatprep.subr.mxu0 0.0
    %136 = vmatpush1.msra.mxu0 %v99
    %137 = vmatprep.subr.mxu0 0.0
    %138 = vmatpush1.msra.mxu0 %v100
    %139 = vmatprep.subr.mxu0 0.0
    %140 = vmatpush1.msra.mxu0 %v101
    %141 = vmatprep.subr.mxu0 0.0
    %142 = vmatpush1.msra.mxu0 0.0
    %143 = vmatprep.subr.mxu0 0.0
    %144 = vmatpush1.msra.mxu0 0.0
    %145 = vmatprep.subr.mxu0 0.0
    %146 = vmatpush1.msra.mxu0 0.0
    %147 = vmatprep.subr.mxu0 0.0
    %148 = vmatpush1.msra.mxu0 0.0
    %149 = vmatprep.subr.mxu0 0.0
    %150 = vmatpush1.msra.mxu0 0.0
    %151 = vmatprep.subr.mxu0 0.0
    %152 = vmatpush1.msra.mxu0 0.0
    %153 = vmatprep.subr.mxu0 0.0
    %154 = vmatpush1.msra.mxu0 0.0
    %155 = vmatprep.subr.mxu0 0.0
    %156 = vmatpush1.msra.mxu0 0.0
    %157 = vmatprep.subr.mxu0 0.0
    %158 = vmatpush1.msra.mxu0 0.0
    %159 = vmatprep.subr.mxu0 0.0
    %160 = vmatpush1.msra.mxu0 0.0
    %161 = vmatprep.subr.mxu0 0.0
    %162 = vmatpush1.msra.mxu0 0.0
    %163 = vmatprep.subr.mxu0 0.0
    %164 = vmatpush1.msra.mxu0 0.0
    %165 = vmatprep.subr.mxu0 0.0
    %166 = vmatpush1.msra.mxu0 0.0
    %167 = vmatprep.subr.mxu0 0.0
    %168 = vmatpush1.msra.mxu0 0.0
    %169 = vmatprep.subr.mxu0 0.0
    %170 = vmatpush1.msra.mxu0 0.0
    %171 = vmatprep.subr.mxu0 0.0
    %172 = vmatpush1.msra.mxu0 0.0
    %173 = vmatprep.mubr.f32.mxu0 0.0
    %174 = vmatmul.mubr.f32.gmra.mrb[0].mxu0 %v107
    %v175 = vpop.f32.mrb[0].mxu0
    %v176 = vadd.f32 %v103, %v175
    %v177 = vpop.f32.mrb[0].mxu0
    %178 = vdwg.mxu0
    %v179 = vxor.u32 %v176, 2147483648
    %v180 = vmul.f32 %v179, 1.442695
    %v181 = vpow.pop %v180
    %v182 = vadd.f32 %v181, 1.0
    %v183 = vrcp.pop %v182
    %v184 = vmul.f32 1.0, %v183
    %v187 = vunpack.c.l.s4 1966171168
    %v188 = vunpack.c.0.s8 %v187
    %v189 = vlaneseq
    %v190 = vshrl.u32 %v189, 7
    %v191 = vsub.s32 %v188, %v190
    %v192 = vrot.slane %v184, %v191
    %v193 = vcombine.high %v192, %v192
    %v195 = vunpack.c.l.s4 1966171168
    %v196 = vunpack.c.0.s8 %v195
    %v197 = vlaneseq
    %v198 = vshrl.u32 %v197, 7
    %v199 = vsub.s32 %v196, %v198
    %v200 = vrot.slane %v192, %v199
    %v202 = vunpack.c.l.s4 1966171168
    %v203 = vunpack.c.0.s8 %v202
    %v204 = vlaneseq
    %v205 = vshrl.u32 %v204, 7
    %v206 = vsub.s32 %v203, %v205
    %v207 = vrot.slane %v193, %v206
    %v208 = vlaneseq
    %v209 = vshrl.u32 %v208, 7
    %v210 = vsub.s32 0, %v209
    %v211 = vrot.slane %v200, %v210
    %v212 = vlaneseq
    %v213 = vshrl.u32 %v212, 7
    %v214 = vsub.s32 0, %v213
    %v215 = vrot.slane %v207, %v214
    %v218 = vmul.f32 %v42, %v211
    %v219 = vmul.f32 %v43, %v211
    %v220 = vmul.f32 %v44, %v211
    %v221 = vmul.f32 %v45, %v211
    %v222 = vmul.f32 %v46, %v211
    %v223 = vmul.f32 %v47, %v211
    %v224 = vmul.f32 %v48, %v211
    %v225 = vmul.f32 %v49, %v211
    %v226 = vmul.f32 %v50, %v215
    %v227 = vmul.f32 %v51, %v215
    %v228 = vmul.f32 %v52, %v215
    %v229 = vmul.f32 %v53, %v215
    %v230 = vmul.f32 %v54, %v215
    %v231 = vmul.f32 %v55, %v215
    %v232 = vmul.f32 %v56, %v215
    %v233 = vmul.f32 %v57, %v215
    %234 = vst [vmem:[#allocation9] sm:$0xff] %v218
    %235 = vst [vmem:[#allocation9 + $0x8] sm:$0xff] %v219
    %236 = vst [vmem:[#allocation9 + $0x10] sm:$0xff] %v220
    %237 = vst [vmem:[#allocation9 + $0x18] sm:$0xff] %v221
    %238 = vst [vmem:[#allocation9 + $0x20] sm:$0xff] %v222
    %239 = vst [vmem:[#allocation9 + $0x28] sm:$0xff] %v223
    %240 = vst [vmem:[#allocation9 + $0x30] sm:$0xff] %v224
    %241 = vst [vmem:[#allocation9 + $0x38] sm:$0xff] %v225
    %242 = vst [vmem:[#allocation9 + $0x40] sm:$0xff] %v226
    %243 = vst [vmem:[#allocation9 + $0x48] sm:$0xff] %v227
    %244 = vst [vmem:[#allocation9 + $0x50] sm:$0xff] %v228
    %245 = vst [vmem:[#allocation9 + $0x58] sm:$0xff] %v229
    %246 = vst [vmem:[#allocation9 + $0x60] sm:$0xff] %v230
    %247 = vst [vmem:[#allocation9 + $0x68] sm:$0xff] %v231
    %248 = vst [vmem:[#allocation9 + $0x70] sm:$0xff] %v232
    %249 = vst [vmem:[#allocation9 + $0x78] sm:$0xff] %v233
    // Predicated region
    $region18: #{tpu_custom_call.1} parent=1 // pred_check
      _
    $region19: #{tpu_custom_call.1} parent=1 // pred_check_branch
      %251 = sbr.rel (0) target = $region21
    $region20: #{tpu_custom_call.1} parent=1 // pred_region
      %s253 = ssub.s32 2048, 2048
      %254 = vsyncadd [#allocation6], %s253
      %s255 = sshll.u32 [#allocation9], 4
      %s256 = int_to_ptr.vmem [resolvable:$true] %s255
      %261 = dma.vmem_to_hbm [thread:$0]  %s256, 2048, %s3, [#allocation6], 128, 128, 8
    $region21: #{tpu_custom_call.1} parent=1 // pred_fallthru
      _
    // Predicated region
    $region22: #{tpu_custom_call.1} parent=1 // pred_check
      _
    $region23: #{tpu_custom_call.1} parent=1 // pred_check_branch
      %263 = sbr.rel (0) target = $region25
    $region24: #{tpu_custom_call.1} parent=1 // pred_region
      %264 = dma.done [#allocation6], 2048
    $region25: #{tpu_custom_call.1} parent=1 // pred_fallthru
      _
    %265 = vsyncpa [#allocation5], 1
    %266 = vsyncpa [#allocation8], 1
    %267 = vsyncpa [#allocation6], 1

</llo_original>
